<compile_context>
chip_gen: v5e
topology: v5e:2x2
jax: 0.10.0
libtpu: 0.0.40
codegen_flags: <defaults>
</compile_context>

<pallas_src>
import jax
import jax.numpy as jnp
from jax.experimental import pallas as pl
from jax.experimental.pallas import tpu as pltpu

_IMG_ELEMS = 3 * 64 * 64      # 12288 = 96 * 128 -> fully lane-dense rows
_BYTES_PER_ELEM = 1 + 4       # u8 in + f32 out streamed per element
_TINY_BYTES = 1 << 20         # below this, skip the custom call


def _cast_kernel(x_ref, o_ref):
    # Elementwise cast to float32 (the `.float()` of the PyTorch forward).
    o_ref[...] = x_ref[...].astype(jnp.float32)


def _round_up(v, m):
    return ((v + m - 1) // m) * m


def _tpu_vmem_bytes():
    try:
        return int(pltpu.get_tpu_info().vmem_capacity_bytes)
    except Exception:
        return 128 << 20  # conservative v5e/v6e default


def _pick_block_n(n):
    """Rows per grid step. Multiple of 32 (u8 (32,128) packing) unless == n."""
    if n <= 128:
        return n
    small_vmem = _tpu_vmem_bytes() <= (64 << 20)  # v7x-class: 64 MiB/TC, 2 TCs
    cap = 256 if small_vmem else 512
    block = min(cap, n)
    if small_vmem:
        # Balance across the two TensorCores: >= 2 roughly-equal grid steps.
        half = _round_up(pl.cdiv(n, 2), 32)
        block = min(block, half)
    if block != n:
        block = max(32, (block // 32) * 32)
    return block


def _vmem_limit_bytes(block_n):
    # Double-buffered input (u8) + output (f32) tiles, plus slack for the
    # compiler's internal scratch. Never the full physical VMEM.
    need = 2 * block_n * _IMG_ELEMS * _BYTES_PER_ELEM
    return min(need + (8 << 20), 100 << 20)


def animal_baseline_net_forward(x, *, force_pallas=False):
    """Reproduces AnimalBaselineNet.forward: view(-1, 3, 64, 64).float()."""
    # `.contiguous().view(-1, 3, 64, 64)` == row-major reshape in JAX;
    # flatten straight to a lane-dense (N, 12288) view for the kernel.
    flat = jnp.reshape(x, (-1, _IMG_ELEMS))
    n = flat.shape[0]
    if n == 0:
        return jnp.zeros((0, 3, 64, 64), jnp.float32)

    total_bytes = n * _IMG_ELEMS * _BYTES_PER_ELEM
    if not force_pallas and total_bytes < _TINY_BYTES:
        # Launch overhead would dominate; XLA's fused reshape+convert wins.
        return jnp.reshape(flat.astype(jnp.float32), (n, 3, 64, 64))

    block_n = _pick_block_n(n)
    grid = (pl.cdiv(n, block_n),)

    out_flat = pl.pallas_call(
        _cast_kernel,
        out_shape=jax.ShapeDtypeStruct((n, _IMG_ELEMS), jnp.float32),
        grid_spec=pltpu.PrefetchScalarGridSpec(
            num_scalar_prefetch=0,
            grid=grid,
            in_specs=[pl.BlockSpec((block_n, _IMG_ELEMS), lambda i: (i, 0))],
            out_specs=pl.BlockSpec((block_n, _IMG_ELEMS), lambda i: (i, 0)),
        ),
        compiler_params=pltpu.CompilerParams(
            dimension_semantics=("parallel",),
            vmem_limit_bytes=_vmem_limit_bytes(block_n),
        ),
        cost_estimate=pl.CostEstimate(
            flops=0,
            transcendentals=0,
            bytes_accessed=total_bytes,
        ),
    )(flat)

    # Back to the NCHW layout the PyTorch module returns.
    return jnp.reshape(out_flat, (n, 3, 64, 64))


if __name__ == "__main__":
    # AnimalBaselineNet.__init__ defines no parameters; only the input matters.
    key = jax.random.PRNGKey(0)

    # Small NCHW batch (batch=2, channels=3, spatial=64 as forced by the
    # view(-1, 3, 64, 64)). uint8 "pixels" make the .float() cast meaningful.
    x = jax.random.randint(key, (2, 3, 64, 64), 0, 256, dtype=jnp.int32).astype(
        jnp.uint8
    )
    expected = jnp.reshape(x, (-1, 3, 64, 64)).astype(jnp.float32)

    # 1) Force the Pallas kernel path even for the tiny batch.
    y = jax.block_until_ready(animal_baseline_net_forward(x, force_pallas=True))
    assert y.shape == (2, 3, 64, 64), y.shape
    assert y.dtype == jnp.float32, y.dtype
    assert bool(jnp.all(y == expected))

    # 2) Auto path for the tiny batch (dispatch bypass) must match too.
    y_auto = jax.block_until_ready(animal_baseline_net_forward(x))
    assert bool(jnp.all(y_auto == expected))

    # 3) Larger batch exercising the tiled kernel path (grid >= 1 step with a
    #    32-aligned / remainder block depending on generation).
    key2 = jax.random.PRNGKey(1)
    x2 = jax.random.randint(
        key2, (160, 3, 64, 64), 0, 256, dtype=jnp.int32
    ).astype(jnp.uint8)
    y2 = jax.block_until_ready(animal_baseline_net_forward(x2))
    assert y2.shape == (160, 3, 64, 64), y2.shape
    assert y2.dtype == jnp.float32, y2.dtype
    expected2 = jnp.reshape(x2, (-1, 3, 64, 64)).astype(jnp.float32)
    assert bool(jnp.all(y2 == expected2))

    print("KERNEL_OK")
</pallas_src>

<mosaic_0001>
module attributes {stable_mosaic.version = 11 : i64} {
  func.func @_cast_kernel(%arg0: i32, %arg1: memref<2x12288xi8, #tpu.memory_space<vmem>>, %arg2: memref<2x12288xf32, #tpu.memory_space<vmem>>) attributes {dimension_semantics = [#tpu.dimension_semantics<parallel>], iteration_bounds = array<i64: 1>, scalar_prefetch = 0 : i64, scratch_operands = 0 : i64, tpu.core_type = #tpu.core_type<tc>, window_params = [{transform_indices = @transform_0, window_bounds = array<i64: 2, 12288>}, {transform_indices = @transform_1, window_bounds = array<i64: 2, 12288>}]} {
    %c0 = arith.constant 0 : index
    %c0_0 = arith.constant 0 : index
    %0 = vector.load %arg1[%c0, %c0_0] : memref<2x12288xi8, #tpu.memory_space<vmem>>, vector<2x12288xi8>
    %1 = arith.uitofp %0 : vector<2x12288xi8> to vector<2x12288xf32>
    %c0_1 = arith.constant 0 : index
    %c0_2 = arith.constant 0 : index
    %2 = vector.load %arg2[%c0_1, %c0_2] : memref<2x12288xf32, #tpu.memory_space<vmem>>, vector<2x12288xf32>
    tpu.vector_store %arg2[%c0_1, %c0_2], %1 {strides = array<i32>} : memref<2x12288xf32, #tpu.memory_space<vmem>>, vector<2x12288xf32>,
    return
  }
  func.func @transform_0(%arg0: i32) -> (i32, i32) {
    %c0_i32 = arith.constant 0 : i32
    %c0_i32_0 = arith.constant 0 : i32
    return %arg0, %c0_i32 : i32, i32
  }
  func.func @transform_1(%arg0: i32) -> (i32, i32) {
    %c0_i32 = arith.constant 0 : i32
    %c0_i32_0 = arith.constant 0 : i32
    return %arg0, %c0_i32 : i32, i32
  }
}

</mosaic_0001>

<llo_original>
// kernel: tpu_custom_call.1
$region0: #{tpu_custom_call.1}
  #allocation0 [shape = 'u32[]', space=smem, size = 0x4, offset = 0x4, fixed_abs, tag = 'smem constant byte address 0x4 - core index']
  #allocation1 [shape = 'u32[72,128]{1,0:T(1,128)}', space=vmem, size = 0x9000, scoped, tag = 'internal scratch']
  %s0 = inlined_call_operand.hbm [shape: u8[2,12288], index: 0, kind: input, shape index: {}]
  %s1 = inlined_call_operand.hbm [shape: f32[2,12288], index: 1, kind: output, shape index: {}]
  %s2 = sld [smem:[#allocation0]]
  $region18: #{tpu_custom_call.1} parent=0
    _
  %s4 = ssub.s32 1, %s2
  %s5 = scalar_select 0, %s4, %s2
  $region1: #{tpu_custom_call.1} parent=0
    #allocation2 [shape = 'u8[49152]{0}', space=vmem, size = 0xc000, scoped, tag = 'input window, operand 0, single buffered']
    #allocation3 [shape = 's32[1]{0}', space=sflag, size = 0x4, scoped, tag = 'scoped memory for tpu_custom_call.1']
    #allocation4 [shape = 's32[1]{0}', space=sflag, size = 0x4, scoped, tag = 'scoped memory for tpu_custom_call.1']
    #allocation5 [shape = 'u8[98304]{0}', space=vmem, size = 0x18000, scoped, tag = 'output window, operand 0, single buffered']
    %6 = vsyncpa [#allocation3], 0
    %7 = vsyncpa [#allocation4], 0
    // Predicated region
    $region2: #{tpu_custom_call.1} parent=1 // pred_check
      _
    $region3: #{tpu_custom_call.1} parent=1 // pred_check_branch
      %9 = sbr.rel (0) target = $region5
    $region4: #{tpu_custom_call.1} parent=1 // pred_region
      %11 = vsyncadd [#allocation3], 0
      %s13 = sshll.u32 %s0, 4
      %s14 = int_to_ptr.hbm [resolvable:$true] %s13
      %s15 = sshll.u32 [#allocation2], 4
      %s16 = int_to_ptr.vmem [resolvable:$true] %s15
      %18 = dma.hbm_to_vmem [thread:$0]  %s14, 1536, %s16, [#allocation3]
    $region5: #{tpu_custom_call.1} parent=1 // pred_fallthru
      _
    // Predicated region
    $region6: #{tpu_custom_call.1} parent=1 // pred_check
      _
    $region7: #{tpu_custom_call.1} parent=1 // pred_check_branch
      %20 = sbr.rel (0) target = $region9
    $region8: #{tpu_custom_call.1} parent=1 // pred_region
      %22 = dma.done [#allocation3], 1536
    $region9: #{tpu_custom_call.1} parent=1 // pred_fallthru
      _
    %v23 = vld [vmem:[#allocation2] sm:$0xff]
    %v24 = vld [vmem:[#allocation2 + $0x8] sm:$0xff]
    %v25 = vld [vmem:[#allocation2 + $0x10] sm:$0xff]
    %v26 = vld [vmem:[#allocation2 + $0x18] sm:$0xff]
    %v27 = vld [vmem:[#allocation2 + $0x20] sm:$0xff]
    %v28 = vld [vmem:[#allocation2 + $0x28] sm:$0xff]
    %v29 = vld [vmem:[#allocation2 + $0x30] sm:$0xff]
    %v30 = vld [vmem:[#allocation2 + $0x38] sm:$0xff]
    %v31 = vld [vmem:[#allocation2 + $0x40] sm:$0xff]
    %v32 = vld [vmem:[#allocation2 + $0x48] sm:$0xff]
    %v33 = vld [vmem:[#allocation2 + $0x50] sm:$0xff]
    %v34 = vld [vmem:[#allocation2 + $0x58] sm:$0xff]
    %v35 = vunpack.c.0.s8 %v23
    %v36 = vunpack.c.1.s8 %v23
    %v37 = vunpack.c.2.s8 %v23
    %v38 = vunpack.c.3.s8 %v23
    %v39 = vunpack.c.0.s8 %v24
    %v40 = vunpack.c.1.s8 %v24
    %v41 = vunpack.c.2.s8 %v24
    %v42 = vunpack.c.3.s8 %v24
    %v43 = vunpack.c.0.s8 %v25
    %v44 = vunpack.c.1.s8 %v25
    %v45 = vunpack.c.2.s8 %v25
    %v46 = vunpack.c.3.s8 %v25
    %v47 = vunpack.c.0.s8 %v26
    %v48 = vunpack.c.1.s8 %v26
    %v49 = vunpack.c.2.s8 %v26
    %v50 = vunpack.c.3.s8 %v26
    %v51 = vunpack.c.0.s8 %v27
    %v52 = vunpack.c.1.s8 %v27
    %v53 = vunpack.c.2.s8 %v27
    %v54 = vunpack.c.3.s8 %v27
    %v55 = vunpack.c.0.s8 %v28
    %v56 = vunpack.c.1.s8 %v28
    %v57 = vunpack.c.2.s8 %v28
    %v58 = vunpack.c.3.s8 %v28
    %v59 = vunpack.c.0.s8 %v29
    %v60 = vunpack.c.1.s8 %v29
    %v61 = vunpack.c.2.s8 %v29
    %v62 = vunpack.c.3.s8 %v29
    %v63 = vunpack.c.0.s8 %v30
    %v64 = vunpack.c.1.s8 %v30
    %v65 = vunpack.c.2.s8 %v30
    %v66 = vunpack.c.3.s8 %v30
    %v67 = vunpack.c.0.s8 %v31
    %v68 = vunpack.c.1.s8 %v31
    %v69 = vunpack.c.2.s8 %v31
    %v70 = vunpack.c.3.s8 %v31
    %v71 = vunpack.c.0.s8 %v32
    %v72 = vunpack.c.1.s8 %v32
    %v73 = vunpack.c.2.s8 %v32
    %v74 = vunpack.c.3.s8 %v32
    %v75 = vunpack.c.0.s8 %v33
    %v76 = vunpack.c.1.s8 %v33
    %v77 = vunpack.c.2.s8 %v33
    %v78 = vunpack.c.3.s8 %v33
    %v79 = vunpack.c.0.s8 %v34
    %v80 = vunpack.c.1.s8 %v34
    %v81 = vunpack.c.2.s8 %v34
    %v82 = vunpack.c.3.s8 %v34
    %v83 = vand.u32 %v35, 255
    %v84 = vand.u32 %v36, 255
    %v85 = vand.u32 %v37, 255
    %v86 = vand.u32 %v38, 255
    %v87 = vand.u32 %v39, 255
    %v88 = vand.u32 %v40, 255
    %v89 = vand.u32 %v41, 255
    %v90 = vand.u32 %v42, 255
    %v91 = vand.u32 %v43, 255
    %v92 = vand.u32 %v44, 255
    %v93 = vand.u32 %v45, 255
    %v94 = vand.u32 %v46, 255
    %v95 = vand.u32 %v47, 255
    %v96 = vand.u32 %v48, 255
    %v97 = vand.u32 %v49, 255
    %v98 = vand.u32 %v50, 255
    %v99 = vand.u32 %v51, 255
    %v100 = vand.u32 %v52, 255
    %v101 = vand.u32 %v53, 255
    %v102 = vand.u32 %v54, 255
    %v103 = vand.u32 %v55, 255
    %v104 = vand.u32 %v56, 255
    %v105 = vand.u32 %v57, 255
    %v106 = vand.u32 %v58, 255
    %v107 = vand.u32 %v59, 255
    %v108 = vand.u32 %v60, 255
    %v109 = vand.u32 %v61, 255
    %v110 = vand.u32 %v62, 255
    %v111 = vand.u32 %v63, 255
    %v112 = vand.u32 %v64, 255
    %v113 = vand.u32 %v65, 255
    %v114 = vand.u32 %v66, 255
    %v115 = vand.u32 %v67, 255
    %v116 = vand.u32 %v68, 255
    %v117 = vand.u32 %v69, 255
    %v118 = vand.u32 %v70, 255
    %v119 = vand.u32 %v71, 255
    %v120 = vand.u32 %v72, 255
    %v121 = vand.u32 %v73, 255
    %v122 = vand.u32 %v74, 255
    %v123 = vand.u32 %v75, 255
    %v124 = vand.u32 %v76, 255
    %v125 = vand.u32 %v77, 255
    %v126 = vand.u32 %v78, 255
    %v127 = vand.u32 %v79, 255
    %v128 = vand.u32 %v80, 255
    %v129 = vand.u32 %v81, 255
    %v130 = vand.u32 %v82, 255
    %v131 = vcvt.s32.f32 %v83
    %v132 = vcvt.s32.f32 %v84
    %v133 = vcvt.s32.f32 %v85
    %v134 = vcvt.s32.f32 %v86
    %v135 = vcvt.s32.f32 %v87
    %v136 = vcvt.s32.f32 %v88
    %v137 = vcvt.s32.f32 %v89
    %v138 = vcvt.s32.f32 %v90
    %v139 = vcvt.s32.f32 %v91
    %v140 = vcvt.s32.f32 %v92
    %v141 = vcvt.s32.f32 %v93
    %v142 = vcvt.s32.f32 %v94
    %v143 = vcvt.s32.f32 %v95
    %v144 = vcvt.s32.f32 %v96
    %v145 = vcvt.s32.f32 %v97
    %v146 = vcvt.s32.f32 %v98
    %v147 = vcvt.s32.f32 %v99
    %v148 = vcvt.s32.f32 %v100
    %v149 = vcvt.s32.f32 %v101
    %v150 = vcvt.s32.f32 %v102
    %v151 = vcvt.s32.f32 %v103
    %v152 = vcvt.s32.f32 %v104
    %v153 = vcvt.s32.f32 %v105
    %v154 = vcvt.s32.f32 %v106
    %v155 = vcvt.s32.f32 %v107
    %v156 = vcvt.s32.f32 %v108
    %v157 = vcvt.s32.f32 %v109
    %v158 = vcvt.s32.f32 %v110
    %v159 = vcvt.s32.f32 %v111
    %v160 = vcvt.s32.f32 %v112
    %v161 = vcvt.s32.f32 %v113
    %v162 = vcvt.s32.f32 %v114
    %v163 = vcvt.s32.f32 %v115
    %v164 = vcvt.s32.f32 %v116
    %v165 = vcvt.s32.f32 %v117
    %v166 = vcvt.s32.f32 %v118
    %v167 = vcvt.s32.f32 %v119
    %v168 = vcvt.s32.f32 %v120
    %v169 = vcvt.s32.f32 %v121
    %v170 = vcvt.s32.f32 %v122
    %v171 = vcvt.s32.f32 %v123
    %v172 = vcvt.s32.f32 %v124
    %v173 = vcvt.s32.f32 %v125
    %v174 = vcvt.s32.f32 %v126
    %v175 = vcvt.s32.f32 %v127
    %v176 = vcvt.s32.f32 %v128
    %v177 = vcvt.s32.f32 %v129
    %v178 = vcvt.s32.f32 %v130
    %v227 = vrot.slane %v131, 2
    %v228 = vrot.slane %v132, 4
    %v229 = vrot.slane %v132, 6
    %v230 = vrot.slane %v133, 2
    %v231 = vrot.slane %v134, 4
    %v232 = vrot.slane %v134, 6
    %v233 = vrot.slane %v135, 2
    %v234 = vrot.slane %v136, 4
    %v235 = vrot.slane %v136, 6
    %v236 = vrot.slane %v137, 2
    %v237 = vrot.slane %v138, 4
    %v238 = vrot.slane %v138, 6
    %v239 = vrot.slane %v139, 2
    %v240 = vrot.slane %v140, 4
    %v241 = vrot.slane %v140, 6
    %v242 = vrot.slane %v141, 2
    %v243 = vrot.slane %v142, 4
    %v244 = vrot.slane %v142, 6
    %v245 = vrot.slane %v143, 2
    %v246 = vrot.slane %v144, 4
    %v247 = vrot.slane %v144, 6
    %v248 = vrot.slane %v145, 2
    %v249 = vrot.slane %v146, 4
    %v250 = vrot.slane %v146, 6
    %v251 = vrot.slane %v147, 2
    %v252 = vrot.slane %v148, 4
    %v253 = vrot.slane %v148, 6
    %v254 = vrot.slane %v149, 2
    %v255 = vrot.slane %v150, 4
    %v256 = vrot.slane %v150, 6
    %v257 = vrot.slane %v151, 2
    %v258 = vrot.slane %v152, 4
    %v259 = vrot.slane %v152, 6
    %v260 = vrot.slane %v153, 2
    %v261 = vrot.slane %v154, 4
    %v262 = vrot.slane %v154, 6
    %v263 = vrot.slane %v155, 2
    %v264 = vrot.slane %v156, 4
    %v265 = vrot.slane %v156, 6
    %v266 = vrot.slane %v157, 2
    %v267 = vrot.slane %v158, 4
    %v268 = vrot.slane %v158, 6
    %v269 = vrot.slane %v159, 2
    %v270 = vrot.slane %v160, 4
    %v271 = vrot.slane %v160, 6
    %v272 = vrot.slane %v161, 2
    %v273 = vrot.slane %v162, 4
    %v274 = vrot.slane %v162, 6
    %v275 = vrot.slane %v163, 2
    %v276 = vrot.slane %v164, 4
    %v277 = vrot.slane %v164, 6
    %v278 = vrot.slane %v165, 2
    %v279 = vrot.slane %v166, 4
    %v280 = vrot.slane %v166, 6
    %v281 = vrot.slane %v167, 2
    %v282 = vrot.slane %v168, 4
    %v283 = vrot.slane %v168, 6
    %v284 = vrot.slane %v169, 2
    %v285 = vrot.slane %v170, 4
    %v286 = vrot.slane %v170, 6
    %v287 = vrot.slane %v171, 2
    %v288 = vrot.slane %v172, 4
    %v289 = vrot.slane %v172, 6
    %v290 = vrot.slane %v173, 2
    %v291 = vrot.slane %v174, 4
    %v292 = vrot.slane %v174, 6
    %v293 = vrot.slane %v175, 2
    %v294 = vrot.slane %v176, 4
    %v295 = vrot.slane %v176, 6
    %v296 = vrot.slane %v177, 2
    %v297 = vrot.slane %v178, 4
    %v298 = vrot.slane %v178, 6
    %vm299 = vcmask 1041408
    %v300 = vsel %vm299, %v131, %v227
    %vm301 = vcmask 1045508
    %v302 = vsel %vm301, %v228, %v229
    %vm303 = vcmask 1043456
    %v304 = vsel %vm303, %v300, %v302
    %v305 = vsel %vm299, %v133, %v230
    %v306 = vsel %vm301, %v231, %v232
    %v307 = vsel %vm303, %v305, %v306
    %v308 = vsel %vm299, %v135, %v233
    %v309 = vsel %vm301, %v234, %v235
    %v310 = vsel %vm303, %v308, %v309
    %v311 = vsel %vm299, %v137, %v236
    %v312 = vsel %vm301, %v237, %v238
    %v313 = vsel %vm303, %v311, %v312
    %v314 = vsel %vm299, %v139, %v239
    %v315 = vsel %vm301, %v240, %v241
    %v316 = vsel %vm303, %v314, %v315
    %v317 = vsel %vm299, %v141, %v242
    %v318 = vsel %vm301, %v243, %v244
    %v319 = vsel %vm303, %v317, %v318
    %v320 = vsel %vm299, %v143, %v245
    %v321 = vsel %vm301, %v246, %v247
    %v322 = vsel %vm303, %v320, %v321
    %v323 = vsel %vm299, %v145, %v248
    %v324 = vsel %vm301, %v249, %v250
    %v325 = vsel %vm303, %v323, %v324
    %v326 = vsel %vm299, %v147, %v251
    %v327 = vsel %vm301, %v252, %v253
    %v328 = vsel %vm303, %v326, %v327
    %v329 = vsel %vm299, %v149, %v254
    %v330 = vsel %vm301, %v255, %v256
    %v331 = vsel %vm303, %v329, %v330
    %v332 = vsel %vm299, %v151, %v257
    %v333 = vsel %vm301, %v258, %v259
    %v334 = vsel %vm303, %v332, %v333
    %v335 = vsel %vm299, %v153, %v260
    %v336 = vsel %vm301, %v261, %v262
    %v337 = vsel %vm303, %v335, %v336
    %v338 = vsel %vm299, %v155, %v263
    %v339 = vsel %vm301, %v264, %v265
    %v340 = vsel %vm303, %v338, %v339
    %v341 = vsel %vm299, %v157, %v266
    %v342 = vsel %vm301, %v267, %v268
    %v343 = vsel %vm303, %v341, %v342
    %v344 = vsel %vm299, %v159, %v269
    %v345 = vsel %vm301, %v270, %v271
    %v346 = vsel %vm303, %v344, %v345
    %v347 = vsel %vm299, %v161, %v272
    %v348 = vsel %vm301, %v273, %v274
    %v349 = vsel %vm303, %v347, %v348
    %v350 = vsel %vm299, %v163, %v275
    %v351 = vsel %vm301, %v276, %v277
    %v352 = vsel %vm303, %v350, %v351
    %v353 = vsel %vm299, %v165, %v278
    %v354 = vsel %vm301, %v279, %v280
    %v355 = vsel %vm303, %v353, %v354
    %v356 = vsel %vm299, %v167, %v281
    %v357 = vsel %vm301, %v282, %v283
    %v358 = vsel %vm303, %v356, %v357
    %v359 = vsel %vm299, %v169, %v284
    %v360 = vsel %vm301, %v285, %v286
    %v361 = vsel %vm303, %v359, %v360
    %v362 = vsel %vm299, %v171, %v287
    %v363 = vsel %vm301, %v288, %v289
    %v364 = vsel %vm303, %v362, %v363
    %v365 = vsel %vm299, %v173, %v290
    %v366 = vsel %vm301, %v291, %v292
    %v367 = vsel %vm303, %v365, %v366
    %v368 = vsel %vm299, %v175, %v293
    %v369 = vsel %vm301, %v294, %v295
    %v370 = vsel %vm303, %v368, %v369
    %v371 = vsel %vm299, %v177, %v296
    %v372 = vsel %vm301, %v297, %v298
    %v373 = vsel %vm303, %v371, %v372
    %398 = vst [vmem:[#allocation5] sm:$0xff] %v304
    %399 = vst [vmem:[#allocation5 + $0x8] sm:$0xff] %v307
    %400 = vst [vmem:[#allocation5 + $0x10] sm:$0xff] %v310
    %401 = vst [vmem:[#allocation5 + $0x18] sm:$0xff] %v313
    %402 = vst [vmem:[#allocation5 + $0x20] sm:$0xff] %v316
    %403 = vst [vmem:[#allocation5 + $0x28] sm:$0xff] %v319
    %404 = vst [vmem:[#allocation5 + $0x30] sm:$0xff] %v322
    %405 = vst [vmem:[#allocation5 + $0x38] sm:$0xff] %v325
    %406 = vst [vmem:[#allocation5 + $0x40] sm:$0xff] %v328
    %407 = vst [vmem:[#allocation5 + $0x48] sm:$0xff] %v331
    %408 = vst [vmem:[#allocation5 + $0x50] sm:$0xff] %v334
    %409 = vst [vmem:[#allocation5 + $0x58] sm:$0xff] %v337
    %410 = vst [vmem:[#allocation5 + $0x60] sm:$0xff] %v340
    %411 = vst [vmem:[#allocation5 + $0x68] sm:$0xff] %v343
    %412 = vst [vmem:[#allocation5 + $0x70] sm:$0xff] %v346
    %413 = vst [vmem:[#allocation5 + $0x78] sm:$0xff] %v349
    %414 = vst [vmem:[#allocation5 + $0x80] sm:$0xff] %v352
    %415 = vst [vmem:[#allocation5 + $0x88] sm:$0xff] %v355
    %416 = vst [vmem:[#allocation5 + $0x90] sm:$0xff] %v358
    %417 = vst [vmem:[#allocation5 + $0x98] sm:$0xff] %v361
    %418 = vst [vmem:[#allocation5 + $0xa0] sm:$0xff] %v364
    %419 = vst [vmem:[#allocation5 + $0xa8] sm:$0xff] %v367
    %420 = vst [vmem:[#allocation5 + $0xb0] sm:$0xff] %v370
    %421 = vst [vmem:[#allocation5 + $0xb8] sm:$0xff] %v373
    // Predicated region
    $region10: #{tpu_custom_call.1} parent=1 // pred_check
      _
    $region11: #{tpu_custom_call.1} parent=1 // pred_check_branch
      %423 = sbr.rel (0) target = $region13
    $region12: #{tpu_custom_call.1} parent=1 // pred_region
      %425 = vsyncadd [#allocation4], 0
      %s427 = sshll.u32 [#allocation5], 4
      %s428 = int_to_ptr.vmem [resolvable:$true] %s427
      %s429 = sshll.u32 %s1, 4
      %s430 = int_to_ptr.hbm [resolvable:$true] %s429
      %432 = dma.vmem_to_hbm [thread:$0]  %s428, 3072, %s430, [#allocation4]
    $region13: #{tpu_custom_call.1} parent=1 // pred_fallthru
      _
    // Predicated region
    $region14: #{tpu_custom_call.1} parent=1 // pred_check
      _
    $region15: #{tpu_custom_call.1} parent=1 // pred_check_branch
      %434 = sbr.rel (0) target = $region17
    $region16: #{tpu_custom_call.1} parent=1 // pred_region
      %436 = dma.done [#allocation4], 3072
    $region17: #{tpu_custom_call.1} parent=1 // pred_fallthru
      _
    %437 = vsyncpa [#allocation3], 1
    %438 = vsyncpa [#allocation4], 1

</llo_original>
